<compile_context>
chip_gen: v7x
topology: tpu7x:2x2x1
jax: 0.10.0
libtpu: 0.0.40
codegen_flags: <defaults>
</compile_context>

<pallas_src>
import functools

import jax
import jax.numpy as jnp
from jax.experimental import pallas as pl
from jax.experimental.pallas import tpu as pltpu

BN_EPS = 1e-5
LANE = 128
SUBLANE = 8
BATCH_ALIGN = 16            # covers bf16 (16, 128) sublane packing of the x tile
STEP_OVERHEAD_ROWS = 32     # ~0.35 us per grid step expressed as "equivalent rows"


def _round_up(x, m):
    return (x + m - 1) // m * m


def _pad_feature(n):
    # Full 128-lane padding only for already-large feature dims; small dims are
    # padded to sublane granularity only (avoids streaming zeros at D=16/L=8).
    return _round_up(n, LANE) if n >= LANE else _round_up(n, SUBLANE)


def _pad_hidden(h):
    # Hidden dim is weight-resident only; 256-align it for full MXU tiles
    # (v6e/v7x MXU is 256-wide) once it is past one lane group.
    return LANE if h <= LANE else _round_up(h, 2 * LANE)


def _nbytes(a):
    return int(a.size) * jnp.dtype(a.dtype).itemsize


# ----------------------------------------------------------------------------
# Kernel: one batch tile end-to-end (matmul + bias + ReLU chain on the MXU/VPU)
# ----------------------------------------------------------------------------
def _vae_kernel(x_ref, eps_ref,
                w1_ref, s1_ref, b1_ref,
                w2_ref, b2_ref,
                w3_ref, s2_ref, b3_ref,
                w4_ref, b4_ref,
                recon_ref, mulv_ref, *, lp):
    # encoder Linear(D, 10D): bf16 matmul, f32 accumulate; eval BN1 applied as
    # an f32 scale+shift (keeps bf16 weights free of BN-scale amplification)
    h = jnp.dot(x_ref[...], w1_ref[...], preferred_element_type=jnp.float32)
    h = jnp.maximum(h * s1_ref[...] + b1_ref[...], 0.0)

    # fused mu|logvar head: one [Hp, 2*Lp] matmul, split in-kernel
    enc = jnp.dot(h.astype(w2_ref.dtype), w2_ref[...],
                  preferred_element_type=jnp.float32) + b2_ref[...]
    mu = enc[:, :lp]
    logvar = enc[:, lp:]

    # reparameterize: z = mu + eps * exp(0.5 * logvar)   (EUP exp, f32)
    z = mu + eps_ref[...] * jnp.exp(0.5 * logvar)

    # eval BN2 as f32 scale (its shift is folded into b3), then decoder Linear
    zb = (z * s2_ref[...]).astype(w3_ref.dtype)
    h2 = jnp.dot(zb, w3_ref[...], preferred_element_type=jnp.float32) + b3_ref[...]
    h2 = jnp.maximum(h2, 0.0)

    recon = jnp.dot(h2.astype(w4_ref.dtype), w4_ref[...],
                    preferred_element_type=jnp.float32) + b4_ref[...]

    recon_ref[...] = recon        # [TB, Dp]
    mulv_ref[...] = enc           # [TB, 2*Lp]  (mu | logvar)


# ----------------------------------------------------------------------------
# Wrapper-side weight prep: f32 BN folding (bias path), pad, cast matmul weights
# ----------------------------------------------------------------------------
def _prep_params(raw, D, L, H, Dp, Lp, Hp, wdtype):
    f32 = jnp.float32

    def pad2(a, r, c):
        return jnp.zeros((r, c), f32).at[: a.shape[0], : a.shape[1]].set(a.astype(f32))

    def pad_row(a, c):
        return jnp.zeros((1, c), f32).at[0, : a.shape[0]].set(a.astype(f32))

    # eval BN1 -> scale s1 / shift b1 applied after the first matmul (f32 path)
    s1 = raw["bn1_g"] * jax.lax.rsqrt(raw["bn1_v"] + BN_EPS)              # [H]
    b1 = (raw["b1"] - raw["bn1_m"]) * s1 + raw["bn1_b"]                   # [H]

    # fused mu|logvar head, kernel layout [H, 2L]: mu cols at [0,L),
    # logvar cols at [Lp, Lp+L)
    w2 = raw["w2"].T                                                      # [H, 2L]
    w2_p = jnp.zeros((Hp, 2 * Lp), f32)
    w2_p = w2_p.at[:H, :L].set(w2[:, :L])
    w2_p = w2_p.at[:H, Lp:Lp + L].set(w2[:, L:])
    b2_p = jnp.zeros((1, 2 * Lp), f32)
    b2_p = b2_p.at[0, :L].set(raw["b2"][:L])
    b2_p = b2_p.at[0, Lp:Lp + L].set(raw["b2"][L:])

    # eval BN2 -> pre-matmul scale s2; its shift folds into the f32 bias b3
    s2 = raw["bn2_g"] * jax.lax.rsqrt(raw["bn2_v"] + BN_EPS)              # [L]
    b3 = (raw["bn2_b"] - raw["bn2_m"] * s2) @ raw["w3"].T + raw["b3"]     # [H]

    return dict(
        w1=pad2(raw["w1"].T, Dp, Hp).astype(wdtype),
        s1=pad_row(s1, Hp), b1=pad_row(b1, Hp),
        w2=w2_p.astype(wdtype), b2=b2_p,
        w3=pad2(raw["w3"].T, Lp, Hp).astype(wdtype),
        s2=pad_row(s2, Lp), b3=pad_row(b3, Hp),
        w4=pad2(raw["w4"].T, Hp, Dp).astype(wdtype),
        b4=pad_row(raw["b4"], Dp),
    )


def _choose_batch_tile(B, batch_tile):
    """Minimize padded rows + per-step overhead; prefer >=2 steps when free."""
    cap = max(BATCH_ALIGN, min(_round_up(batch_tile, BATCH_ALIGN),
                               _round_up(B, BATCH_ALIGN)))
    best_tb, best_cost = cap, None
    tb = cap
    while tb >= BATCH_ALIGN:
        bp = _round_up(B, tb)
        cost = bp + (bp // tb) * STEP_OVERHEAD_ROWS
        if best_cost is None or cost < best_cost:
            best_tb, best_cost = tb, cost
        tb -= BATCH_ALIGN
    # v7x megacore only engages with >=2 grid steps; split if it adds no work.
    if _round_up(B, best_tb) // best_tb < 2:
        half = _round_up(max(best_tb // 2, BATCH_ALIGN), BATCH_ALIGN)
        if half < best_tb and _round_up(B, half) <= _round_up(B, best_tb):
            best_tb = half
    return best_tb


def _vmem_budget_bytes():
    """75% of per-core physical VMEM (≈48 MiB v7x, ≈96 MiB v5e/v6e)."""
    cap = 64 * 2 ** 20          # conservative fallback (v7x per-core physical)
    try:
        info = pltpu.get_tpu_info()
        c = getattr(info, "vmem_capacity_bytes", None)
        if c:
            cap = int(c)
    except Exception:
        pass
    return (3 * cap) // 4


def _resident_spec(shape):
    """Whole-array, grid-invariant, single-buffered weight spec."""
    index_map = lambda i: (0,) * len(shape)
    try:
        return pl.BlockSpec(shape, index_map, pipeline_mode=pl.Buffered(1))
    except (TypeError, AttributeError):
        # older API: fall back to default (double-buffered) resident spec
        return pl.BlockSpec(shape, index_map)


def vae_forward(x, eps, raw_params, *, batch_tile=512, matmul_dtype=jnp.bfloat16):
    """x: [B, D] f32, eps: [B, L] f32, raw_params: PyTorch-layout weights/BN."""
    B, D = x.shape
    L = eps.shape[1]
    H = raw_params["w1"].shape[0]          # 10 * D

    Dp = _pad_feature(D)
    Lp = _pad_feature(L)
    Hp = _pad_hidden(H)

    p = _prep_params(raw_params, D, L, H, Dp, Lp, Hp, matmul_dtype)
    weight_bytes = sum(_nbytes(v) for v in p.values())      # single-buffered

    TB = _choose_batch_tile(B, batch_tile)
    budget = _vmem_budget_bytes()

    def vmem_est(tb):
        in_tile = tb * Dp * 2 + tb * Lp * 4                  # x bf16, eps f32
        out_tile = tb * Dp * 4 + tb * 2 * Lp * 4             # recon, mu|logvar f32
        act = tb * Hp * 12 + tb * 2 * Lp * 8 + tb * Lp * 8   # h/h2 f32+bf16, enc, z
        return weight_bytes + 2 * (in_tile + out_tile) + act

    # shrink the batch tile until the estimate fits the per-core VMEM budget
    while vmem_est(TB) > budget and TB > BATCH_ALIGN:
        new_tb = max(BATCH_ALIGN, _round_up(TB // 2, BATCH_ALIGN))
        if new_tb >= TB:
            break
        TB = new_tb

    Bp = _round_up(B, TB)
    grid = (Bp // TB,)

    x_p = jnp.zeros((Bp, Dp), matmul_dtype).at[:B, :D].set(x.astype(matmul_dtype))
    eps_p = jnp.zeros((Bp, Lp), jnp.float32).at[:B, :L].set(eps.astype(jnp.float32))

    kernel = functools.partial(_vae_kernel, lp=Lp)

    flops = 2 * Bp * (Dp * Hp + Hp * 2 * Lp + Lp * Hp + Hp * Dp)
    bytes_accessed = (_nbytes(x_p) + _nbytes(eps_p) + weight_bytes
                      + Bp * Dp * 4 + Bp * 2 * Lp * 4)
    cost = pl.CostEstimate(flops=int(flops), transcendentals=int(Bp * Lp),
                           bytes_accessed=int(bytes_accessed))

    vmem_limit = int(min(max(int(1.25 * vmem_est(TB)), 32 * 2 ** 20), budget))

    recon_p, mulv_p = pl.pallas_call(
        kernel,
        grid=grid,
        in_specs=[
            pl.BlockSpec((TB, Dp), lambda i: (i, 0)),        # x tile (pipelined)
            pl.BlockSpec((TB, Lp), lambda i: (i, 0)),        # eps tile (pipelined)
            _resident_spec((Dp, Hp)),                        # w1
            _resident_spec((1, Hp)),                         # s1 (BN1 scale, f32)
            _resident_spec((1, Hp)),                         # b1 (BN1 shift folded)
            _resident_spec((Hp, 2 * Lp)),                    # w2 (fused mu|logvar)
            _resident_spec((1, 2 * Lp)),                     # b2
            _resident_spec((Lp, Hp)),                        # w3
            _resident_spec((1, Lp)),                         # s2 (BN2 scale, f32)
            _resident_spec((1, Hp)),                         # b3 (BN2 shift folded)
            _resident_spec((Hp, Dp)),                        # w4
            _resident_spec((1, Dp)),                         # b4
        ],
        out_specs=(
            pl.BlockSpec((TB, Dp), lambda i: (i, 0)),        # recon (padded)
            pl.BlockSpec((TB, 2 * Lp), lambda i: (i, 0)),    # mu|logvar (padded)
        ),
        out_shape=(
            jax.ShapeDtypeStruct((Bp, Dp), jnp.float32),
            jax.ShapeDtypeStruct((Bp, 2 * Lp), jnp.float32),
        ),
        compiler_params=pltpu.CompilerParams(
            dimension_semantics=("parallel",),
            vmem_limit_bytes=vmem_limit,
        ),
        cost_estimate=cost,
    )(x_p, eps_p, p["w1"], p["s1"], p["b1"], p["w2"], p["b2"],
      p["w3"], p["s2"], p["b3"], p["w4"], p["b4"])

    recon = recon_p[:B, :D]
    mu = mulv_p[:B, :L]
    logvar = mulv_p[:B, Lp:Lp + L]
    return recon, mu, logvar


# ----------------------------------------------------------------------------
# Deterministic synthetic params (PyTorch layout: Linear W is [out, in])
# ----------------------------------------------------------------------------
def init_params(key, input_dim, latent_dim):
    D, L, H = input_dim, latent_dim, input_dim * 10
    keys = jax.random.split(key, 4)

    def lin(k, out_f, in_f):
        bound = 1.0 / jnp.sqrt(jnp.float32(in_f))
        w = jax.random.uniform(k, (out_f, in_f), jnp.float32, -bound, bound)
        b = jax.random.uniform(jax.random.fold_in(k, 1), (out_f,),
                               jnp.float32, -bound, bound)
        return w, b

    w1, b1 = lin(keys[0], H, D)          # encoder Linear(D, 10D)
    w2, b2 = lin(keys[1], 2 * L, H)      # encoder Linear(10D, 2L)
    w3, b3 = lin(keys[2], H, L)          # decoder Linear(L, 10D)
    w4, b4 = lin(keys[3], D, H)          # decoder Linear(10D, D)

    return {
        "w1": w1, "b1": b1, "w2": w2, "b2": b2,
        "w3": w3, "b3": b3, "w4": w4, "b4": b4,
        # fresh-init BatchNorm running stats / affine
        "bn1_g": jnp.ones((H,), jnp.float32), "bn1_b": jnp.zeros((H,), jnp.float32),
        "bn1_m": jnp.zeros((H,), jnp.float32), "bn1_v": jnp.ones((H,), jnp.float32),
        "bn2_g": jnp.ones((L,), jnp.float32), "bn2_b": jnp.zeros((L,), jnp.float32),
        "bn2_m": jnp.zeros((L,), jnp.float32), "bn2_v": jnp.ones((L,), jnp.float32),
    }


def vae_reference(x, eps, p):
    """Pure-JAX f32 reference of the same eval-mode forward (unfolded BN)."""
    L = p["bn2_g"].shape[0]
    h = x @ p["w1"].T + p["b1"]
    h = (h - p["bn1_m"]) / jnp.sqrt(p["bn1_v"] + BN_EPS) * p["bn1_g"] + p["bn1_b"]
    h = jnp.maximum(h, 0.0)
    enc = h @ p["w2"].T + p["b2"]
    mu, logvar = enc[:, :L], enc[:, L:]
    z = mu + eps * jnp.exp(0.5 * logvar)
    zn = (z - p["bn2_m"]) / jnp.sqrt(p["bn2_v"] + BN_EPS) * p["bn2_g"] + p["bn2_b"]
    h2 = jnp.maximum(zn @ p["w3"].T + p["b3"], 0.0)
    recon = h2 @ p["w4"].T + p["b4"]
    return recon, mu, logvar


if __name__ == "__main__":
    input_dim = 16     # D
    latent_dim = 8     # L
    batch = 8

    key = jax.random.PRNGKey(0)
    k_x, k_eps, k_p = jax.random.split(key, 3)

    x = jax.random.normal(k_x, (batch, input_dim), jnp.float32)
    eps = jax.random.normal(k_eps, (batch, latent_dim), jnp.float32)
    params = init_params(k_p, input_dim, latent_dim)

    recon, mu, logvar = jax.jit(vae_forward)(x, eps, params)
    jax.block_until_ready((recon, mu, logvar))

    assert recon.shape == (batch, input_dim)
    assert mu.shape == (batch, latent_dim) and logvar.shape == (batch, latent_dim)

    r_ref, mu_ref, lv_ref = vae_reference(x, eps, params)
    # bf16 matmul operands with f32 accumulation -> relaxed tolerance
    assert jnp.allclose(recon, r_ref, atol=5e-2, rtol=5e-2), \
        float(jnp.max(jnp.abs(recon - r_ref)))
    assert jnp.allclose(mu, mu_ref, atol=5e-2, rtol=5e-2), \
        float(jnp.max(jnp.abs(mu - mu_ref)))
    assert jnp.allclose(logvar, lv_ref, atol=5e-2, rtol=5e-2), \
        float(jnp.max(jnp.abs(logvar - lv_ref)))

    print("KERNEL_OK")
</pallas_src>

<mosaic_0001>
module attributes {stable_mosaic.version = 11 : i64} {
  func.func @_vae_kernel(%arg0: i32, %arg1: memref<16x16xbf16, #tpu.memory_space<vmem>>, %arg2: memref<16x8xf32, #tpu.memory_space<vmem>>, %arg3: memref<16x256xbf16, #tpu.memory_space<vmem>>, %arg4: memref<1x256xf32, #tpu.memory_space<vmem>>, %arg5: memref<1x256xf32, #tpu.memory_space<vmem>>, %arg6: memref<256x16xbf16, #tpu.memory_space<vmem>>, %arg7: memref<1x16xf32, #tpu.memory_space<vmem>>, %arg8: memref<8x256xbf16, #tpu.memory_space<vmem>>, %arg9: memref<1x8xf32, #tpu.memory_space<vmem>>, %arg10: memref<1x256xf32, #tpu.memory_space<vmem>>, %arg11: memref<256x16xbf16, #tpu.memory_space<vmem>>, %arg12: memref<1x16xf32, #tpu.memory_space<vmem>>, %arg13: memref<16x16xf32, #tpu.memory_space<vmem>>, %arg14: memref<16x16xf32, #tpu.memory_space<vmem>>) attributes {dimension_semantics = [#tpu.dimension_semantics<parallel>], iteration_bounds = array<i64: 1>, scalar_prefetch = 0 : i64, scratch_operands = 0 : i64, tpu.core_type = #tpu.core_type<tc>, window_params = [{transform_indices = @transform_0, window_bounds = array<i64: 16, 16>}, {transform_indices = @transform_1, window_bounds = array<i64: 16, 8>}, {pipeline_mode = #tpu.pipeline_mode<synchronous>, transform_indices = @transform_2, window_bounds = array<i64: 16, 256>}, {pipeline_mode = #tpu.pipeline_mode<synchronous>, transform_indices = @transform_3, window_bounds = array<i64: 1, 256>}, {pipeline_mode = #tpu.pipeline_mode<synchronous>, transform_indices = @transform_4, window_bounds = array<i64: 1, 256>}, {pipeline_mode = #tpu.pipeline_mode<synchronous>, transform_indices = @transform_5, window_bounds = array<i64: 256, 16>}, {pipeline_mode = #tpu.pipeline_mode<synchronous>, transform_indices = @transform_6, window_bounds = array<i64: 1, 16>}, {pipeline_mode = #tpu.pipeline_mode<synchronous>, transform_indices = @transform_7, window_bounds = array<i64: 8, 256>}, {pipeline_mode = #tpu.pipeline_mode<synchronous>, transform_indices = @transform_8, window_bounds = array<i64: 1, 8>}, {pipeline_mode = #tpu.pipeline_mode<synchronous>, transform_indices = @transform_9, window_bounds = array<i64: 1, 256>}, {pipeline_mode = #tpu.pipeline_mode<synchronous>, transform_indices = @transform_10, window_bounds = array<i64: 256, 16>}, {pipeline_mode = #tpu.pipeline_mode<synchronous>, transform_indices = @transform_11, window_bounds = array<i64: 1, 16>}, {transform_indices = @transform_12, window_bounds = array<i64: 16, 16>}, {transform_indices = @transform_13, window_bounds = array<i64: 16, 16>}]} {
    %c0 = arith.constant 0 : index
    %c0_0 = arith.constant 0 : index
    %0 = vector.load %arg1[%c0, %c0_0] : memref<16x16xbf16, #tpu.memory_space<vmem>>, vector<16x16xbf16>
    %c0_1 = arith.constant 0 : index
    %c0_2 = arith.constant 0 : index
    %1 = vector.load %arg3[%c0_1, %c0_2] : memref<16x256xbf16, #tpu.memory_space<vmem>>, vector<16x256xbf16>
    %cst = arith.constant dense<0.000000e+00> : vector<16x256xf32>
    %2 = tpu.matmul %0, %1, %cst {dimension_numbers = #tpu.dot_dimension_numbers<[1], [0], [0], [1], [0, 0, 1, 1], [], []>} : vector<16x16xbf16>, vector<16x256xbf16>, vector<16x256xf32> -> vector<16x256xf32>
    %c0_3 = arith.constant 0 : index
    %c0_4 = arith.constant 0 : index
    %3 = vector.load %arg4[%c0_3, %c0_4] : memref<1x256xf32, #tpu.memory_space<vmem>>, vector<1x256xf32>
    %4 = vector.broadcast %3 : vector<1x256xf32> to vector<16x256xf32>
    %5 = arith.mulf %2, %4 : vector<16x256xf32>
    %c0_5 = arith.constant 0 : index
    %c0_6 = arith.constant 0 : index
    %6 = vector.load %arg5[%c0_5, %c0_6] : memref<1x256xf32, #tpu.memory_space<vmem>>, vector<1x256xf32>
    %7 = vector.broadcast %6 : vector<1x256xf32> to vector<16x256xf32>
    %8 = arith.addf %5, %7 : vector<16x256xf32>
    %cst_7 = arith.constant 0.000000e+00 : f32
    %9 = vector.broadcast %cst_7 : f32 to vector<16x256xf32>
    %10 = arith.maximumf %8, %9 : vector<16x256xf32>
    %11 = arith.truncf %10 : vector<16x256xf32> to vector<16x256xbf16>
    %c0_8 = arith.constant 0 : index
    %c0_9 = arith.constant 0 : index
    %12 = vector.load %arg6[%c0_8, %c0_9] : memref<256x16xbf16, #tpu.memory_space<vmem>>, vector<256x16xbf16>
    %cst_10 = arith.constant dense<0.000000e+00> : vector<16x16xf32>
    %13 = tpu.matmul %11, %12, %cst_10 {dimension_numbers = #tpu.dot_dimension_numbers<[1], [0], [0], [1], [0, 0, 1, 1], [], []>} : vector<16x256xbf16>, vector<256x16xbf16>, vector<16x16xf32> -> vector<16x16xf32>
    %c0_11 = arith.constant 0 : index
    %c0_12 = arith.constant 0 : index
    %14 = vector.load %arg7[%c0_11, %c0_12] : memref<1x16xf32, #tpu.memory_space<vmem>>, vector<1x16xf32>
    %15 = vector.broadcast %14 : vector<1x16xf32> to vector<16x16xf32>
    %16 = arith.addf %13, %15 : vector<16x16xf32>
    %17 = vector.extract_strided_slice %16 {offsets = [0, 0], sizes = [16, 8], strides = [1, 1]} : vector<16x16xf32> to vector<16x8xf32>
    %18 = vector.extract_strided_slice %16 {offsets = [0, 8], sizes = [16, 8], strides = [1, 1]} : vector<16x16xf32> to vector<16x8xf32>
    %c0_13 = arith.constant 0 : index
    %c0_14 = arith.constant 0 : index
    %19 = vector.load %arg2[%c0_13, %c0_14] : memref<16x8xf32, #tpu.memory_space<vmem>>, vector<16x8xf32>
    %cst_15 = arith.constant 5.000000e-01 : f32
    %20 = vector.broadcast %cst_15 : f32 to vector<16x8xf32>
    %21 = arith.mulf %20, %18 : vector<16x8xf32>
    %22 = math.exp %21 : vector<16x8xf32>
    %23 = arith.mulf %19, %22 : vector<16x8xf32>
    %24 = arith.addf %17, %23 : vector<16x8xf32>
    %c0_16 = arith.constant 0 : index
    %c0_17 = arith.constant 0 : index
    %25 = vector.load %arg9[%c0_16, %c0_17] : memref<1x8xf32, #tpu.memory_space<vmem>>, vector<1x8xf32>
    %26 = vector.broadcast %25 : vector<1x8xf32> to vector<16x8xf32>
    %27 = arith.mulf %24, %26 : vector<16x8xf32>
    %28 = arith.truncf %27 : vector<16x8xf32> to vector<16x8xbf16>
    %c0_18 = arith.constant 0 : index
    %c0_19 = arith.constant 0 : index
    %29 = vector.load %arg8[%c0_18, %c0_19] : memref<8x256xbf16, #tpu.memory_space<vmem>>, vector<8x256xbf16>
    %cst_20 = arith.constant dense<0.000000e+00> : vector<16x256xf32>
    %30 = tpu.matmul %28, %29, %cst_20 {dimension_numbers = #tpu.dot_dimension_numbers<[1], [0], [0], [1], [0, 0, 1, 1], [], []>} : vector<16x8xbf16>, vector<8x256xbf16>, vector<16x256xf32> -> vector<16x256xf32>
    %c0_21 = arith.constant 0 : index
    %c0_22 = arith.constant 0 : index
    %31 = vector.load %arg10[%c0_21, %c0_22] : memref<1x256xf32, #tpu.memory_space<vmem>>, vector<1x256xf32>
    %32 = vector.broadcast %31 : vector<1x256xf32> to vector<16x256xf32>
    %33 = arith.addf %30, %32 : vector<16x256xf32>
    %cst_23 = arith.constant 0.000000e+00 : f32
    %34 = vector.broadcast %cst_23 : f32 to vector<16x256xf32>
    %35 = arith.maximumf %33, %34 : vector<16x256xf32>
    %36 = arith.truncf %35 : vector<16x256xf32> to vector<16x256xbf16>
    %c0_24 = arith.constant 0 : index
    %c0_25 = arith.constant 0 : index
    %37 = vector.load %arg11[%c0_24, %c0_25] : memref<256x16xbf16, #tpu.memory_space<vmem>>, vector<256x16xbf16>
    %cst_26 = arith.constant dense<0.000000e+00> : vector<16x16xf32>
    %38 = tpu.matmul %36, %37, %cst_26 {dimension_numbers = #tpu.dot_dimension_numbers<[1], [0], [0], [1], [0, 0, 1, 1], [], []>} : vector<16x256xbf16>, vector<256x16xbf16>, vector<16x16xf32> -> vector<16x16xf32>
    %c0_27 = arith.constant 0 : index
    %c0_28 = arith.constant 0 : index
    %39 = vector.load %arg12[%c0_27, %c0_28] : memref<1x16xf32, #tpu.memory_space<vmem>>, vector<1x16xf32>
    %40 = vector.broadcast %39 : vector<1x16xf32> to vector<16x16xf32>
    %41 = arith.addf %38, %40 : vector<16x16xf32>
    %c0_29 = arith.constant 0 : index
    %c0_30 = arith.constant 0 : index
    %42 = vector.load %arg13[%c0_29, %c0_30] : memref<16x16xf32, #tpu.memory_space<vmem>>, vector<16x16xf32>
    tpu.vector_store %arg13[%c0_29, %c0_30], %41 {strides = array<i32>} : memref<16x16xf32, #tpu.memory_space<vmem>>, vector<16x16xf32>,
    %c0_31 = arith.constant 0 : index
    %c0_32 = arith.constant 0 : index
    %43 = vector.load %arg14[%c0_31, %c0_32] : memref<16x16xf32, #tpu.memory_space<vmem>>, vector<16x16xf32>
    tpu.vector_store %arg14[%c0_31, %c0_32], %16 {strides = array<i32>} : memref<16x16xf32, #tpu.memory_space<vmem>>, vector<16x16xf32>,
    return
  }
  func.func @transform_0(%arg0: i32) -> (i32, i32) {
    %c0_i32 = arith.constant 0 : i32
    %c0_i32_0 = arith.constant 0 : i32
    return %arg0, %c0_i32 : i32, i32
  }
  func.func @transform_1(%arg0: i32) -> (i32, i32) {
    %c0_i32 = arith.constant 0 : i32
    %c0_i32_0 = arith.constant 0 : i32
    return %arg0, %c0_i32 : i32, i32
  }
  func.func @transform_2(%arg0: i32) -> (i32, i32) {
    %c0_i32 = arith.constant 0 : i32
    %c0_i32_0 = arith.constant 0 : i32
    %c0_i32_1 = arith.constant 0 : i32
    return %c0_i32, %c0_i32_0 : i32, i32
  }
  func.func @transform_3(%arg0: i32) -> (i32, i32) {
    %c0_i32 = arith.constant 0 : i32
    %c0_i32_0 = arith.constant 0 : i32
    %c0_i32_1 = arith.constant 0 : i32
    return %c0_i32, %c0_i32_0 : i32, i32
  }
  func.func @transform_4(%arg0: i32) -> (i32, i32) {
    %c0_i32 = arith.constant 0 : i32
    %c0_i32_0 = arith.constant 0 : i32
    %c0_i32_1 = arith.constant 0 : i32
    return %c0_i32, %c0_i32_0 : i32, i32
  }
  func.func @transform_5(%arg0: i32) -> (i32, i32) {
    %c0_i32 = arith.constant 0 : i32
    %c0_i32_0 = arith.constant 0 : i32
    %c0_i32_1 = arith.constant 0 : i32
    return %c0_i32, %c0_i32_0 : i32, i32
  }
  func.func @transform_6(%arg0: i32) -> (i32, i32) {
    %c0_i32 = arith.constant 0 : i32
    %c0_i32_0 = arith.constant 0 : i32
    %c0_i32_1 = arith.constant 0 : i32
    return %c0_i32, %c0_i32_0 : i32, i32
  }
  func.func @transform_7(%arg0: i32) -> (i32, i32) {
    %c0_i32 = arith.constant 0 : i32
    %c0_i32_0 = arith.constant 0 : i32
    %c0_i32_1 = arith.constant 0 : i32
    return %c0_i32, %c0_i32_0 : i32, i32
  }
  func.func @transform_8(%arg0: i32) -> (i32, i32) {
    %c0_i32 = arith.constant 0 : i32
    %c0_i32_0 = arith.constant 0 : i32
    %c0_i32_1 = arith.constant 0 : i32
    return %c0_i32, %c0_i32_0 : i32, i32
  }
  func.func @transform_9(%arg0: i32) -> (i32, i32) {
    %c0_i32 = arith.constant 0 : i32
    %c0_i32_0 = arith.constant 0 : i32
    %c0_i32_1 = arith.constant 0 : i32
    return %c0_i32, %c0_i32_0 : i32, i32
  }
  func.func @transform_10(%arg0: i32) -> (i32, i32) {
    %c0_i32 = arith.constant 0 : i32
    %c0_i32_0 = arith.constant 0 : i32
    %c0_i32_1 = arith.constant 0 : i32
    return %c0_i32, %c0_i32_0 : i32, i32
  }
  func.func @transform_11(%arg0: i32) -> (i32, i32) {
    %c0_i32 = arith.constant 0 : i32
    %c0_i32_0 = arith.constant 0 : i32
    %c0_i32_1 = arith.constant 0 : i32
    return %c0_i32, %c0_i32_0 : i32, i32
  }
  func.func @transform_12(%arg0: i32) -> (i32, i32) {
    %c0_i32 = arith.constant 0 : i32
    %c0_i32_0 = arith.constant 0 : i32
    return %arg0, %c0_i32 : i32, i32
  }
  func.func @transform_13(%arg0: i32) -> (i32, i32) {
    %c0_i32 = arith.constant 0 : i32
    %c0_i32_0 = arith.constant 0 : i32
    return %arg0, %c0_i32 : i32, i32
  }
}

</mosaic_0001>

<llo_original>
// kernel: vae_forward.1
$region0: #{vae_forward.1}
  #allocation0 [shape = 'u32[]', space=smem, size = 0x4, offset = 0x4, fixed_abs, tag = 'smem constant byte address 0x4 - core index']
  #allocation1 [shape = 'u32[144,128]{1,0:T(1,128)}', space=vmem, size = 0x12000, scoped, tag = 'internal scratch']
  %s0 = inlined_call_operand.vmem [shape: bf16[16,16], index: 0, kind: input, shape index: {}]
  %s1 = inlined_call_operand.vmem [shape: f32[16,8], index: 1, kind: input, shape index: {}]
  %s2 = inlined_call_operand.vmem [shape: bf16[16,256], index: 2, kind: input, shape index: {}]
  %s3 = inlined_call_operand.vmem [shape: f32[1,256], index: 3, kind: input, shape index: {}]
  %s4 = inlined_call_operand.vmem [shape: f32[1,256], index: 4, kind: input, shape index: {}]
  %s5 = inlined_call_operand.vmem [shape: bf16[256,16], index: 5, kind: input, shape index: {}]
  %s6 = inlined_call_operand.vmem [shape: f32[1,16], index: 6, kind: input, shape index: {}]
  %s7 = inlined_call_operand.vmem [shape: bf16[8,256], index: 7, kind: input, shape index: {}]
  %s8 = inlined_call_operand.vmem [shape: f32[1,8], index: 8, kind: input, shape index: {}]
  %s9 = inlined_call_operand.vmem [shape: f32[1,256], index: 9, kind: input, shape index: {}]
  %s10 = inlined_call_operand.vmem [shape: bf16[256,16], index: 10, kind: input, shape index: {}]
  %s11 = inlined_call_operand.vmem [shape: f32[1,16], index: 11, kind: input, shape index: {}]
  %s12 = inlined_call_operand.vmem [shape: f32[16,16], index: 12, kind: output, shape index: {0}]
  %s13 = inlined_call_operand.vmem [shape: f32[16,16], index: 13, kind: output, shape index: {1}]
  %14 = xla_tuple %s12, %s13
  %s15 = sld [smem:[#allocation0]]
  $region66: #{vae_forward.1} parent=0
    _
  %s17 = ssub.s32 1, %s15
  %s18 = scalar_select 0, %s17, %s15
  // Predicated region
  $region2: #{vae_forward.1} parent=0 // pred_check
    _
  $region3: #{vae_forward.1} parent=0 // pred_check_branch
    %20 = sbr.rel (0) target = $region5
  $region4: #{vae_forward.1} parent=0 // pred_region
    _
  $region5: #{vae_forward.1} parent=0 // pred_fallthru
    _
  // Predicated region
  $region6: #{vae_forward.1} parent=0 // pred_check
    _
  $region7: #{vae_forward.1} parent=0 // pred_check_branch
    %22 = sbr.rel (0) target = $region9
  $region8: #{vae_forward.1} parent=0 // pred_region
    _
  $region9: #{vae_forward.1} parent=0 // pred_fallthru
    _
  // Predicated region
  $region10: #{vae_forward.1} parent=0 // pred_check
    _
  $region11: #{vae_forward.1} parent=0 // pred_check_branch
    %24 = sbr.rel (0) target = $region13
  $region12: #{vae_forward.1} parent=0 // pred_region
    _
  $region13: #{vae_forward.1} parent=0 // pred_fallthru
    _
  // Predicated region
  $region14: #{vae_forward.1} parent=0 // pred_check
    _
  $region15: #{vae_forward.1} parent=0 // pred_check_branch
    %26 = sbr.rel (0) target = $region17
  $region16: #{vae_forward.1} parent=0 // pred_region
    _
  $region17: #{vae_forward.1} parent=0 // pred_fallthru
    _
  // Predicated region
  $region18: #{vae_forward.1} parent=0 // pred_check
    _
  $region19: #{vae_forward.1} parent=0 // pred_check_branch
    %28 = sbr.rel (0) target = $region21
  $region20: #{vae_forward.1} parent=0 // pred_region
    _
  $region21: #{vae_forward.1} parent=0 // pred_fallthru
    _
  // Predicated region
  $region22: #{vae_forward.1} parent=0 // pred_check
    _
  $region23: #{vae_forward.1} parent=0 // pred_check_branch
    %30 = sbr.rel (0) target = $region25
  $region24: #{vae_forward.1} parent=0 // pred_region
    _
  $region25: #{vae_forward.1} parent=0 // pred_fallthru
    _
  // Predicated region
  $region26: #{vae_forward.1} parent=0 // pred_check
    _
  $region27: #{vae_forward.1} parent=0 // pred_check_branch
    %32 = sbr.rel (0) target = $region29
  $region28: #{vae_forward.1} parent=0 // pred_region
    _
  $region29: #{vae_forward.1} parent=0 // pred_fallthru
    _
  // Predicated region
  $region30: #{vae_forward.1} parent=0 // pred_check
    _
  $region31: #{vae_forward.1} parent=0 // pred_check_branch
    %34 = sbr.rel (0) target = $region33
  $region32: #{vae_forward.1} parent=0 // pred_region
    _
  $region33: #{vae_forward.1} parent=0 // pred_fallthru
    _
  // Predicated region
  $region34: #{vae_forward.1} parent=0 // pred_check
    _
  $region35: #{vae_forward.1} parent=0 // pred_check_branch
    %36 = sbr.rel (0) target = $region37
  $region36: #{vae_forward.1} parent=0 // pred_region
    _
  $region37: #{vae_forward.1} parent=0 // pred_fallthru
    _
  // Predicated region
  $region38: #{vae_forward.1} parent=0 // pred_check
    _
  $region39: #{vae_forward.1} parent=0 // pred_check_branch
    %38 = sbr.rel (0) target = $region41
  $region40: #{vae_forward.1} parent=0 // pred_region
    _
  $region41: #{vae_forward.1} parent=0 // pred_fallthru
    _
  // Predicated region
  $region42: #{vae_forward.1} parent=0 // pred_check
    _
  $region43: #{vae_forward.1} parent=0 // pred_check_branch
    %40 = sbr.rel (0) target = $region45
  $region44: #{vae_forward.1} parent=0 // pred_region
    _
  $region45: #{vae_forward.1} parent=0 // pred_fallthru
    _
  // Predicated region
  $region46: #{vae_forward.1} parent=0 // pred_check
    _
  $region47: #{vae_forward.1} parent=0 // pred_check_branch
    %42 = sbr.rel (0) target = $region49
  $region48: #{vae_forward.1} parent=0 // pred_region
    _
  $region49: #{vae_forward.1} parent=0 // pred_fallthru
    _
  %v44 = vld [vmem:[%s0] sm:$0xf]
  %v45 = vld [vmem:[%s0 + $0x4] sm:$0xf]
  %v46 = vld [vmem:[%s2] sm:$0xff]
  %v47 = vld [vmem:[%s2 + $0x8] sm:$0xff]
  %v50 = vunpack.c.l.b16 %v44
  %v51 = vunpack.c.l.b16 %v45
  %v52 = vpack.c.b16 %v51, %v50
  %v55 = vunpack.c.l.b16 %v46
  %v56 = vunpack.c.h.b16 %v46
  %v57 = vunpack.c.l.b16 %v47
  %v58 = vunpack.c.h.b16 %v47
  %v59 = vpack.c.b16 %v57, %v55
  %v60 = vpack.c.b16 %v58, %v56
  %vm63 = vcmask 130048
  %v65 = vsel %vm63, %v52, 0
  %67 = vmatprep.subr.bf16.mxu0 %v60
  %68 = vmatpush1.bf16.msra.mxu0 %v59
  %69 = vmatprep.subr.bf16.mxu0 0
  %70 = vmatpush1.bf16.msra.mxu0 0
  %71 = vmatprep.subr.bf16.mxu0 0
  %72 = vmatpush1.bf16.msra.mxu0 0
  %73 = vmatprep.subr.bf16.mxu0 0
  %74 = vmatpush1.bf16.msra.mxu0 0
  %75 = vmatprep.subr.bf16.mxu0 0
  %76 = vmatpush1.bf16.msra.mxu0 0
  %77 = vmatprep.subr.bf16.mxu0 0
  %78 = vmatpush1.bf16.msra.mxu0 0
  %79 = vmatprep.subr.bf16.mxu0 0
  %80 = vmatpush1.bf16.msra.mxu0 0
  %81 = vmatprep.subr.bf16.mxu0 0
  %82 = vmatpush1.bf16.msra.mxu0 0
  %83 = vmatprep.subr.bf16.mxu0 0
  %84 = vmatpush1.bf16.msra.mxu0 0
  %85 = vmatprep.subr.bf16.mxu0 0
  %86 = vmatpush1.bf16.msra.mxu0 0
  %87 = vmatprep.subr.bf16.mxu0 0
  %88 = vmatpush1.bf16.msra.mxu0 0
  %89 = vmatprep.subr.bf16.mxu0 0
  %90 = vmatpush1.bf16.msra.mxu0 0
  %91 = vmatprep.subr.bf16.mxu0 0
  %92 = vmatpush1.bf16.msra.mxu0 0
  %93 = vmatprep.subr.bf16.mxu0 0
  %94 = vmatpush1.bf16.msra.mxu0 0
  %95 = vmatprep.subr.bf16.mxu0 0
  %96 = vmatpush1.bf16.msra.mxu0 0
  %97 = vmatprep.subr.bf16.mxu0 0
  %98 = vmatpush1.bf16.msra.mxu0 0
  %99 = vmatprep.mubr.bf16.mxu0 0
  %100 = vmatmul.mubr.bf16.gmra.mrb[0].mxu0 %v65
  %v101 = vpop.f32.mrb[0].mxu0
  %v102 = vadd.f32 0.0, %v101
  %v103 = vpop.f32.mrb[0].mxu0
  %v104 = vadd.f32 0.0, %v103
  %v105 = vpop.f32.mrb[0].mxu0
  %v106 = vadd.f32 0.0, %v105
  %v107 = vpop.f32.mrb[0].mxu0
  %v108 = vadd.f32 0.0, %v107
  %109 = vdwg.mxu0
  %v110 = vld [vmem:[%s3] sm:$0x3]
  %v112 = vlaneseq
  %v113 = vshrl.u32 %v112, 7
  %v114 = vsub.s32 0, %v113
  %v115 = vrot.slane %v110, %v114
  %v116 = vlaneseq
  %v117 = vshrl.u32 %v116, 7
  %v118 = vsub.s32 1, %v117
  %v119 = vrot.slane %v110, %v118
  %v122 = vmul.f32 %v102, %v115
  %v123 = vmul.f32 %v104, %v119
  %v124 = vmul.f32 %v106, %v115
  %v125 = vmul.f32 %v108, %v119
  %v126 = vld [vmem:[%s4] sm:$0x3]
  %v128 = vlaneseq
  %v129 = vshrl.u32 %v128, 7
  %v130 = vsub.s32 0, %v129
  %v131 = vrot.slane %v126, %v130
  %v132 = vlaneseq
  %v133 = vshrl.u32 %v132, 7
  %v134 = vsub.s32 1, %v133
  %v135 = vrot.slane %v126, %v134
  %v138 = vadd.f32 %v122, %v131
  %v139 = vadd.f32 %v123, %v135
  %v140 = vadd.f32 %v124, %v131
  %v141 = vadd.f32 %v125, %v135
  %v142 = vmax.f32 %v138, 0.0
  %v143 = vmax.f32 %v139, 0.0
  %v144 = vmax.f32 %v140, 0.0
  %v145 = vmax.f32 %v141, 0.0
  %v146 = vpack.c.bf16 %v144, %v142
  %v147 = vpack.c.bf16 %v145, %v143
  %v148 = vld [vmem:[%s5] sm:$0xf]
  %v149 = vld [vmem:[%s5 + $0x4] sm:$0xf]
  %v150 = vld [vmem:[%s5 + $0x8] sm:$0xf]
  %v151 = vld [vmem:[%s5 + $0xc] sm:$0xf]
  %v152 = vld [vmem:[%s5 + $0x10] sm:$0xf]
  %v153 = vld [vmem:[%s5 + $0x14] sm:$0xf]
  %v154 = vld [vmem:[%s5 + $0x18] sm:$0xf]
  %v155 = vld [vmem:[%s5 + $0x1c] sm:$0xf]
  %v156 = vld [vmem:[%s5 + $0x20] sm:$0xf]
  %v157 = vld [vmem:[%s5 + $0x24] sm:$0xf]
  %v158 = vld [vmem:[%s5 + $0x28] sm:$0xf]
  %v159 = vld [vmem:[%s5 + $0x2c] sm:$0xf]
  %v160 = vld [vmem:[%s5 + $0x30] sm:$0xf]
  %v161 = vld [vmem:[%s5 + $0x34] sm:$0xf]
  %v162 = vld [vmem:[%s5 + $0x38] sm:$0xf]
  %v163 = vld [vmem:[%s5 + $0x3c] sm:$0xf]
  %v164 = vld [vmem:[%s5 + $0x40] sm:$0xf]
  %v165 = vld [vmem:[%s5 + $0x44] sm:$0xf]
  %v166 = vld [vmem:[%s5 + $0x48] sm:$0xf]
  %v167 = vld [vmem:[%s5 + $0x4c] sm:$0xf]
  %v168 = vld [vmem:[%s5 + $0x50] sm:$0xf]
  %v169 = vld [vmem:[%s5 + $0x54] sm:$0xf]
  %v170 = vld [vmem:[%s5 + $0x58] sm:$0xf]
  %v171 = vld [vmem:[%s5 + $0x5c] sm:$0xf]
  %v172 = vld [vmem:[%s5 + $0x60] sm:$0xf]
  %v173 = vld [vmem:[%s5 + $0x64] sm:$0xf]
  %v174 = vld [vmem:[%s5 + $0x68] sm:$0xf]
  %v175 = vld [vmem:[%s5 + $0x6c] sm:$0xf]
  %v176 = vld [vmem:[%s5 + $0x70] sm:$0xf]
  %v177 = vld [vmem:[%s5 + $0x74] sm:$0xf]
  %v178 = vld [vmem:[%s5 + $0x78] sm:$0xf]
  %v179 = vld [vmem:[%s5 + $0x7c] sm:$0xf]
  %v180 = vld [vmem:[%s6] sm:$0x1]
  %v182 = vlaneseq
  %v183 = vshrl.u32 %v182, 7
  %v184 = vsub.s32 0, %v183
  %v185 = vrot.slane %v180, %v184
  %v219 = vunpack.c.l.b16 %v148
  %v220 = vunpack.c.l.b16 %v149
  %v221 = vunpack.c.l.b16 %v150
  %v222 = vunpack.c.l.b16 %v151
  %v223 = vunpack.c.l.b16 %v152
  %v224 = vunpack.c.l.b16 %v153
  %v225 = vunpack.c.l.b16 %v154
  %v226 = vunpack.c.l.b16 %v155
  %v227 = vunpack.c.l.b16 %v156
  %v228 = vunpack.c.l.b16 %v157
  %v229 = vunpack.c.l.b16 %v158
  %v230 = vunpack.c.l.b16 %v159
  %v231 = vunpack.c.l.b16 %v160
  %v232 = vunpack.c.l.b16 %v161
  %v233 = vunpack.c.l.b16 %v162
  %v234 = vunpack.c.l.b16 %v163
  %v235 = vunpack.c.l.b16 %v164
  %v236 = vunpack.c.l.b16 %v165
  %v237 = vunpack.c.l.b16 %v166
  %v238 = vunpack.c.l.b16 %v167
  %v239 = vunpack.c.l.b16 %v168
  %v240 = vunpack.c.l.b16 %v169
  %v241 = vunpack.c.l.b16 %v170
  %v242 = vunpack.c.l.b16 %v171
  %v243 = vunpack.c.l.b16 %v172
  %v244 = vunpack.c.l.b16 %v173
  %v245 = vunpack.c.l.b16 %v174
  %v246 = vunpack.c.l.b16 %v175
  %v247 = vunpack.c.l.b16 %v176
  %v248 = vunpack.c.l.b16 %v177
  %v249 = vunpack.c.l.b16 %v178
  %v250 = vunpack.c.l.b16 %v179
  %v251 = vpack.c.b16 %v220, %v219
  %v252 = vpack.c.b16 %v222, %v221
  %v253 = vpack.c.b16 %v224, %v223
  %v254 = vpack.c.b16 %v226, %v225
  %v255 = vpack.c.b16 %v228, %v227
  %v256 = vpack.c.b16 %v230, %v229
  %v257 = vpack.c.b16 %v232, %v231
  %v258 = vpack.c.b16 %v234, %v233
  %v259 = vpack.c.b16 %v236, %v235
  %v260 = vpack.c.b16 %v238, %v237
  %v261 = vpack.c.b16 %v240, %v239
  %v262 = vpack.c.b16 %v242, %v241
  %v263 = vpack.c.b16 %v244, %v243
  %v264 = vpack.c.b16 %v246, %v245
  %v265 = vpack.c.b16 %v248, %v247
  %v266 = vpack.c.b16 %v250, %v249
  %283 = vmatprep.subr.bf16.mxu0 0
  %284 = vmatpush1.bf16.msra.mxu0 %v251
  %285 = vmatprep.subr.bf16.mxu0 0
  %286 = vmatpush1.bf16.msra.mxu0 %v252
  %287 = vmatprep.subr.bf16.mxu0 0
  %288 = vmatpush1.bf16.msra.mxu0 %v253
  %289 = vmatprep.subr.bf16.mxu0 0
  %290 = vmatpush1.bf16.msra.mxu0 %v254
  %291 = vmatprep.subr.bf16.mxu0 0
  %292 = vmatpush1.bf16.msra.mxu0 %v255
  %293 = vmatprep.subr.bf16.mxu0 0
  %294 = vmatpush1.bf16.msra.mxu0 %v256
  %295 = vmatprep.subr.bf16.mxu0 0
  %296 = vmatpush1.bf16.msra.mxu0 %v257
  %297 = vmatprep.subr.bf16.mxu0 0
  %298 = vmatpush1.bf16.msra.mxu0 %v258
  %299 = vmatprep.subr.bf16.mxu0 0
  %300 = vmatpush1.bf16.msra.mxu0 %v259
  %301 = vmatprep.subr.bf16.mxu0 0
  %302 = vmatpush1.bf16.msra.mxu0 %v260
  %303 = vmatprep.subr.bf16.mxu0 0
  %304 = vmatpush1.bf16.msra.mxu0 %v261
  %305 = vmatprep.subr.bf16.mxu0 0
  %306 = vmatpush1.bf16.msra.mxu0 %v262
  %307 = vmatprep.subr.bf16.mxu0 0
  %308 = vmatpush1.bf16.msra.mxu0 %v263
  %309 = vmatprep.subr.bf16.mxu0 0
  %310 = vmatpush1.bf16.msra.mxu0 %v264
  %311 = vmatprep.subr.bf16.mxu0 0
  %312 = vmatpush1.bf16.msra.mxu0 %v265
  %313 = vmatprep.subr.bf16.mxu0 0
  %314 = vmatpush1.bf16.msra.mxu0 %v266
  %315 = vmatprep.mubr.bf16.mxu0 %v147
  %316 = vmatmul.mubr.bf16.gmra.mrb[0].mxu0 %v146
  %v317 = vpop.f32.mrb[0].mxu0
  %v318 = vadd.f32 %v185, %v317
  %v319 = vpop.f32.mrb[0].mxu0
  %v320 = vpop.f32.mrb[0].mxu0
  %v321 = vadd.f32 %v185, %v320
  %v322 = vpop.f32.mrb[0].mxu0
  %323 = vdwg.mxu0
  %v324 = vld [vmem:[%s1] sm:$0xff]
  %v325 = vld [vmem:[%s1 + $0x8] sm:$0xff]
  %v326 = vmul.f32 %v318, 0.5
  %v327 = vmul.f32 %v321, 0.5
  %v328 = vmul.f32 %v326, 1.442695
  %v329 = vpow.pop %v328
  %v330 = vmul.f32 %v327, 1.442695
  %v331 = vpow.pop %v330
  %334 = vrot.lane.b32.xlu0 %v329, 120
  %v335 = vpop.permute.xlu0 %334
  %336 = vrot.lane.b32.xlu0 %v331, 120
  %v337 = vpop.permute.xlu0 %336
  %v340 = vmul.f32 %v324, %v335
  %v341 = vmul.f32 %v325, %v337
  %v342 = vadd.f32 %v318, %v340
  %v343 = vadd.f32 %v321, %v341
  %v344 = vld [vmem:[%s8] sm:$0x1]
  %v346 = vlaneseq
  %v347 = vshrl.u32 %v346, 7
  %v348 = vsub.s32 0, %v347
  %v349 = vrot.slane %v344, %v348
  %v351 = vmul.f32 %v342, %v349
  %v352 = vmul.f32 %v343, %v349
  %v353 = vpack.c.bf16 %v352, %v351
  %v354 = vld [vmem:[%s7] sm:$0xff]
  %v355 = vld [vmem:[%s9] sm:$0x3]
  %v357 = vlaneseq
  %v358 = vshrl.u32 %v357, 7
  %v359 = vsub.s32 0, %v358
  %v360 = vrot.slane %v355, %v359
  %v361 = vlaneseq
  %v362 = vshrl.u32 %v361, 7
  %v363 = vsub.s32 1, %v362
  %v364 = vrot.slane %v355, %v363
  %v368 = vunpack.c.l.b16 %v354
  %v369 = vunpack.c.h.b16 %v354
  %v370 = vpack.c.b16 %v368, %v368
  %v371 = vpack.c.b16 %v369, %v369
  %vm372 = vcmask 64512
  %v374 = vsel %vm372, %v353, 0
  %vm376 = vcmask 1043456
  %v378 = vsel %vm376, %v370, 0
  %v381 = vsel %vm376, %v371, 0
  %383 = vmatprep.subr.bf16.mxu0 %v381
  %384 = vmatpush1.bf16.msra.mxu0 %v378
  %385 = vmatprep.subr.bf16.mxu0 0
  %386 = vmatpush1.bf16.msra.mxu0 0
  %387 = vmatprep.subr.bf16.mxu0 0
  %388 = vmatpush1.bf16.msra.mxu0 0
  %389 = vmatprep.subr.bf16.mxu0 0
  %390 = vmatpush1.bf16.msra.mxu0 0
  %391 = vmatprep.subr.bf16.mxu0 0
  %392 = vmatpush1.bf16.msra.mxu0 0
  %393 = vmatprep.subr.bf16.mxu0 0
  %394 = vmatpush1.bf16.msra.mxu0 0
  %395 = vmatprep.subr.bf16.mxu0 0
  %396 = vmatpush1.bf16.msra.mxu0 0
  %397 = vmatprep.subr.bf16.mxu0 0
  %398 = vmatpush1.bf16.msra.mxu0 0
  %399 = vmatprep.subr.bf16.mxu0 0
  %400 = vmatpush1.bf16.msra.mxu0 0
  %401 = vmatprep.subr.bf16.mxu0 0
  %402 = vmatpush1.bf16.msra.mxu0 0
  %403 = vmatprep.subr.bf16.mxu0 0
  %404 = vmatpush1.bf16.msra.mxu0 0
  %405 = vmatprep.subr.bf16.mxu0 0
  %406 = vmatpush1.bf16.msra.mxu0 0
  %407 = vmatprep.subr.bf16.mxu0 0
  %408 = vmatpush1.bf16.msra.mxu0 0
  %409 = vmatprep.subr.bf16.mxu0 0
  %410 = vmatpush1.bf16.msra.mxu0 0
  %411 = vmatprep.subr.bf16.mxu0 0
  %412 = vmatpush1.bf16.msra.mxu0 0
  %413 = vmatprep.subr.bf16.mxu0 0
  %414 = vmatpush1.bf16.msra.mxu0 0
  %415 = vmatprep.mubr.bf16.mxu0 0
  %416 = vmatmul.mubr.bf16.gmra.mrb[0].mxu0 %v374
  %v417 = vpop.f32.mrb[0].mxu0
  %v418 = vadd.f32 %v360, %v417
  %v419 = vpop.f32.mrb[0].mxu0
  %v420 = vadd.f32 %v364, %v419
  %v421 = vpop.f32.mrb[0].mxu0
  %v422 = vadd.f32 %v360, %v421
  %v423 = vpop.f32.mrb[0].mxu0
  %v424 = vadd.f32 %v364, %v423
  %425 = vdwg.mxu0
  %v426 = vmax.f32 %v418, 0.0
  %v427 = vmax.f32 %v420, 0.0
  %v428 = vmax.f32 %v422, 0.0
  %v429 = vmax.f32 %v424, 0.0
  %v430 = vpack.c.bf16 %v428, %v426
  %v431 = vpack.c.bf16 %v429, %v427
  %v432 = vld [vmem:[%s10] sm:$0xf]
  %v433 = vld [vmem:[%s10 + $0x4] sm:$0xf]
  %v434 = vld [vmem:[%s10 + $0x8] sm:$0xf]
  %v435 = vld [vmem:[%s10 + $0xc] sm:$0xf]
  %v436 = vld [vmem:[%s10 + $0x10] sm:$0xf]
  %v437 = vld [vmem:[%s10 + $0x14] sm:$0xf]
  %v438 = vld [vmem:[%s10 + $0x18] sm:$0xf]
  %v439 = vld [vmem:[%s10 + $0x1c] sm:$0xf]
  %v440 = vld [vmem:[%s10 + $0x20] sm:$0xf]
  %v441 = vld [vmem:[%s10 + $0x24] sm:$0xf]
  %v442 = vld [vmem:[%s10 + $0x28] sm:$0xf]
  %v443 = vld [vmem:[%s10 + $0x2c] sm:$0xf]
  %v444 = vld [vmem:[%s10 + $0x30] sm:$0xf]
  %v445 = vld [vmem:[%s10 + $0x34] sm:$0xf]
  %v446 = vld [vmem:[%s10 + $0x38] sm:$0xf]
  %v447 = vld [vmem:[%s10 + $0x3c] sm:$0xf]
  %v448 = vld [vmem:[%s10 + $0x40] sm:$0xf]
  %v449 = vld [vmem:[%s10 + $0x44] sm:$0xf]
  %v450 = vld [vmem:[%s10 + $0x48] sm:$0xf]
  %v451 = vld [vmem:[%s10 + $0x4c] sm:$0xf]
  %v452 = vld [vmem:[%s10 + $0x50] sm:$0xf]
  %v453 = vld [vmem:[%s10 + $0x54] sm:$0xf]
  %v454 = vld [vmem:[%s10 + $0x58] sm:$0xf]
  %v455 = vld [vmem:[%s10 + $0x5c] sm:$0xf]
  %v456 = vld [vmem:[%s10 + $0x60] sm:$0xf]
  %v457 = vld [vmem:[%s10 + $0x64] sm:$0xf]
  %v458 = vld [vmem:[%s10 + $0x68] sm:$0xf]
  %v459 = vld [vmem:[%s10 + $0x6c] sm:$0xf]
  %v460 = vld [vmem:[%s10 + $0x70] sm:$0xf]
  %v461 = vld [vmem:[%s10 + $0x74] sm:$0xf]
  %v462 = vld [vmem:[%s10 + $0x78] sm:$0xf]
  %v463 = vld [vmem:[%s10 + $0x7c] sm:$0xf]
  %v464 = vld [vmem:[%s11] sm:$0x1]
  %v466 = vlaneseq
  %v467 = vshrl.u32 %v466, 7
  %v468 = vsub.s32 0, %v467
  %v469 = vrot.slane %v464, %v468
  %v503 = vunpack.c.l.b16 %v432
  %v504 = vunpack.c.l.b16 %v433
  %v505 = vunpack.c.l.b16 %v434
  %v506 = vunpack.c.l.b16 %v435
  %v507 = vunpack.c.l.b16 %v436
  %v508 = vunpack.c.l.b16 %v437
  %v509 = vunpack.c.l.b16 %v438
  %v510 = vunpack.c.l.b16 %v439
  %v511 = vunpack.c.l.b16 %v440
  %v512 = vunpack.c.l.b16 %v441
  %v513 = vunpack.c.l.b16 %v442
  %v514 = vunpack.c.l.b16 %v443
  %v515 = vunpack.c.l.b16 %v444
  %v516 = vunpack.c.l.b16 %v445
  %v517 = vunpack.c.l.b16 %v446
  %v518 = vunpack.c.l.b16 %v447
  %v519 = vunpack.c.l.b16 %v448
  %v520 = vunpack.c.l.b16 %v449
  %v521 = vunpack.c.l.b16 %v450
  %v522 = vunpack.c.l.b16 %v451
  %v523 = vunpack.c.l.b16 %v452
  %v524 = vunpack.c.l.b16 %v453
  %v525 = vunpack.c.l.b16 %v454
  %v526 = vunpack.c.l.b16 %v455
  %v527 = vunpack.c.l.b16 %v456
  %v528 = vunpack.c.l.b16 %v457
  %v529 = vunpack.c.l.b16 %v458
  %v530 = vunpack.c.l.b16 %v459
  %v531 = vunpack.c.l.b16 %v460
  %v532 = vunpack.c.l.b16 %v461
  %v533 = vunpack.c.l.b16 %v462
  %v534 = vunpack.c.l.b16 %v463
  %v535 = vpack.c.b16 %v504, %v503
  %v536 = vpack.c.b16 %v506, %v505
  %v537 = vpack.c.b16 %v508, %v507
  %v538 = vpack.c.b16 %v510, %v509
  %v539 = vpack.c.b16 %v512, %v511
  %v540 = vpack.c.b16 %v514, %v513
  %v541 = vpack.c.b16 %v516, %v515
  %v542 = vpack.c.b16 %v518, %v517
  %v543 = vpack.c.b16 %v520, %v519
  %v544 = vpack.c.b16 %v522, %v521
  %v545 = vpack.c.b16 %v524, %v523
  %v546 = vpack.c.b16 %v526, %v525
  %v547 = vpack.c.b16 %v528, %v527
  %v548 = vpack.c.b16 %v530, %v529
  %v549 = vpack.c.b16 %v532, %v531
  %v550 = vpack.c.b16 %v534, %v533
  %567 = vmatprep.subr.bf16.mxu0 0
  %568 = vmatpush1.bf16.msra.mxu0 %v535
  %569 = vmatprep.subr.bf16.mxu0 0
  %570 = vmatpush1.bf16.msra.mxu0 %v536
  %571 = vmatprep.subr.bf16.mxu0 0
  %572 = vmatpush1.bf16.msra.mxu0 %v537
  %573 = vmatprep.subr.bf16.mxu0 0
  %574 = vmatpush1.bf16.msra.mxu0 %v538
  %575 = vmatprep.subr.bf16.mxu0 0
  %576 = vmatpush1.bf16.msra.mxu0 %v539
  %577 = vmatprep.subr.bf16.mxu0 0
  %578 = vmatpush1.bf16.msra.mxu0 %v540
  %579 = vmatprep.subr.bf16.mxu0 0
  %580 = vmatpush1.bf16.msra.mxu0 %v541
  %581 = vmatprep.subr.bf16.mxu0 0
  %582 = vmatpush1.bf16.msra.mxu0 %v542
  %583 = vmatprep.subr.bf16.mxu0 0
  %584 = vmatpush1.bf16.msra.mxu0 %v543
  %585 = vmatprep.subr.bf16.mxu0 0
  %586 = vmatpush1.bf16.msra.mxu0 %v544
  %587 = vmatprep.subr.bf16.mxu0 0
  %588 = vmatpush1.bf16.msra.mxu0 %v545
  %589 = vmatprep.subr.bf16.mxu0 0
  %590 = vmatpush1.bf16.msra.mxu0 %v546
  %591 = vmatprep.subr.bf16.mxu0 0
  %592 = vmatpush1.bf16.msra.mxu0 %v547
  %593 = vmatprep.subr.bf16.mxu0 0
  %594 = vmatpush1.bf16.msra.mxu0 %v548
  %595 = vmatprep.subr.bf16.mxu0 0
  %596 = vmatpush1.bf16.msra.mxu0 %v549
  %597 = vmatprep.subr.bf16.mxu0 0
  %598 = vmatpush1.bf16.msra.mxu0 %v550
  %599 = vmatprep.mubr.bf16.mxu0 %v431
  %600 = vmatmul.mubr.bf16.gmra.mrb[0].mxu0 %v430
  %v601 = vpop.f32.mrb[0].mxu0
  %v602 = vadd.f32 %v469, %v601
  %v603 = vpop.f32.mrb[0].mxu0
  %v604 = vpop.f32.mrb[0].mxu0
  %v605 = vadd.f32 %v469, %v604
  %v606 = vpop.f32.mrb[0].mxu0
  %607 = vdwg.mxu0
  %608 = vst.msk [vmem:[%s12] sm:$0xff] %vm63, %v602
  %609 = vst.msk [vmem:[%s12 + $0x8] sm:$0xff] %vm63, %v605
  %610 = vst.msk [vmem:[%s13] sm:$0xff] %vm63, %v318
  %611 = vst.msk [vmem:[%s13 + $0x8] sm:$0xff] %vm63, %v321
  // Predicated region
  $region50: #{vae_forward.1} parent=0 // pred_check
    _
  $region51: #{vae_forward.1} parent=0 // pred_check_branch
    %613 = sbr.rel (0) target = $region53
  $region52: #{vae_forward.1} parent=0 // pred_region
    _
  $region53: #{vae_forward.1} parent=0 // pred_fallthru
    _
  // Predicated region
  $region54: #{vae_forward.1} parent=0 // pred_check
    _
  $region55: #{vae_forward.1} parent=0 // pred_check_branch
    %615 = sbr.rel (0) target = $region57
  $region56: #{vae_forward.1} parent=0 // pred_region
    _
  $region57: #{vae_forward.1} parent=0 // pred_fallthru
    _
  // Predicated region
  $region58: #{vae_forward.1} parent=0 // pred_check
    _
  $region59: #{vae_forward.1} parent=0 // pred_check_branch
    %617 = sbr.rel (0) target = $region61
  $region60: #{vae_forward.1} parent=0 // pred_region
    _
  $region61: #{vae_forward.1} parent=0 // pred_fallthru
    _
  // Predicated region
  $region62: #{vae_forward.1} parent=0 // pred_check
    _
  $region63: #{vae_forward.1} parent=0 // pred_check_branch
    %619 = sbr.rel (0) target = $region65
  $region64: #{vae_forward.1} parent=0 // pred_region
    _
  $region65: #{vae_forward.1} parent=0 // pred_fallthru
    _

</llo_original>
